<compile_context>
chip_gen: v5e
topology: v5e:2x2
jax: 0.10.0
libtpu: 0.0.40
codegen_flags: <defaults>
</compile_context>

<pallas_src>
import functools

import jax
import jax.numpy as jnp
from jax.experimental import pallas as pl
from jax.experimental.pallas import tpu as pltpu


def _round_up(v, m):
    return (v + m - 1) // m * m


def _mmoe_kernel(x_ref, w_ref, b_ref, out_ref, *,
                 n_expert, n_task, expert_dim, out_lanes):
    he = n_expert * expert_dim
    tb = x_ref.shape[0]

    # One fused MXU matmul covering every expert and every gate; f32 accumulate.
    z = jnp.dot(x_ref[...], w_ref[...], preferred_element_type=jnp.float32)
    z = z + b_ref[...]                                 # single fused f32 bias add

    h = jnp.maximum(z[:, :he], 0.0)                    # all experts, [tb, n_expert*E]

    # --- grid-invariant 0/1 helper matrices, generated in-kernel -------------
    # rep[e, l] = 1 iff lane l belongs to expert e's E-wide block.
    row = jax.lax.broadcasted_iota(jnp.int32, (n_expert, he), 0)
    lane = jax.lax.broadcasted_iota(jnp.int32, (n_expert, he), 1)
    rep = ((lane >= row * expert_dim) &
           (lane < (row + 1) * expert_dim)).astype(jnp.float32)

    # src/dst iotas for the block-sum + task-placement selection matrices.
    src = jax.lax.broadcasted_iota(jnp.int32, (he, out_lanes), 0)
    dst = jax.lax.broadcasted_iota(jnp.int32, (he, out_lanes), 1)

    out = jnp.zeros((tb, out_lanes), jnp.float32)
    for t in range(n_task):
        lo = he + t * n_expert
        logits = z[:, lo:lo + n_expert]                # [tb, n_expert]
        logits = logits - jnp.max(logits, axis=1, keepdims=True)
        p = jnp.exp(logits)
        gate = p / jnp.sum(p, axis=1, keepdims=True)   # exact softmax

        # Lane-repeat the gate to [tb, n_expert*E] with a tiny 0/1 matmul (MXU).
        gate_rep = jnp.dot(gate, rep, preferred_element_type=jnp.float32)

        # sel[e*E + d, t*E + d] = 1  (block-sum over experts + place at task t's
        # lane offset), built without integer div/mod.
        sel = jnp.zeros((he, out_lanes), jnp.float32)
        for e in range(n_expert):
            hit = ((src >= e * expert_dim) &
                   (src < (e + 1) * expert_dim) &
                   (src - dst == (e - t) * expert_dim))
            sel = sel + hit.astype(jnp.float32)

        # Gated mixture reduced + placed on the MXU; one VPU add into the slab.
        out = out + jnp.dot(gate_rep * h, sel, preferred_element_type=jnp.float32)

    # Single lane-dense (>=128-lane) unmasked store of all tasks at once.
    out_ref[...] = out.astype(out_ref.dtype)


@functools.partial(jax.jit,
                   static_argnames=("compute_dtype", "block_b", "split_tasks"))
def mmoe_forward(x, w_experts, b_experts, w_gates, b_gates, *,
                 compute_dtype=jnp.bfloat16, block_b=1024, split_tasks=True):
    """MMOE forward (use_gate=True).

    Weight layout: w_experts [n_expert, F, E], w_gates [n_task, F, n_expert]
    (nn.Linear weights already transposed to [in, out]).

    Returns a list of n_task [B, E] towers (split_tasks=True, matches the
    PyTorch module) or a fused [B, n_task, E] array (split_tasks=False, avoids
    per-task column-slice copies).
    """
    B, F = x.shape
    n_expert, _, E = w_experts.shape
    n_task = w_gates.shape[0]
    he, ng = n_expert * E, n_task * n_expert
    out_lanes = max(_round_up(n_task * E, 128), 128)   # lane-dense output slab

    # ---- one-time layout prep (wrapper side, folded under jit) --------------
    w_fused = jnp.concatenate(
        [jnp.transpose(w_experts, (1, 0, 2)).reshape(F, he),
         jnp.transpose(w_gates, (1, 0, 2)).reshape(F, ng)], axis=1)
    b_fused = jnp.concatenate(
        [b_experts.reshape(he), b_gates.reshape(ng)]
    ).astype(jnp.float32).reshape(1, he + ng)

    if compute_dtype is not None:   # bf16 default: halves x HBM traffic, f32 accum
        x = x.astype(compute_dtype)
        w_fused = w_fused.astype(compute_dtype)
    itemsize = jnp.dtype(x.dtype).itemsize

    # ---- batch tile selection (no padding; cdiv grid handles the remainder) --
    row_align = 8 if itemsize == 4 else 16
    # Aim for >=2 grid steps so both v7x TensorCores get work.
    tb = max(row_align, min(block_b, _round_up(pl.cdiv(B, 2), row_align)))
    if tb >= B:
        tb = B                       # block == full dim: always a legal block
    else:
        # Crude VMEM budget: double-buffered x/out tiles + fused weights + f32 temps.
        def vmem_bytes(t):
            return (2 * t * F * itemsize            # x double buffer
                    + 2 * t * out_lanes * 4         # out double buffer
                    + F * (he + ng) * itemsize      # fused weights (grid-invariant)
                    + 6 * t * he * 4)               # in-kernel f32 temporaries
        budget = 12 * 1024 * 1024                   # conservative across v5e/v6e/v7x
        while tb > row_align and vmem_bytes(tb) > budget:
            tb = max(row_align, _round_up(tb // 2, row_align))

    grid = (pl.cdiv(B, tb),)

    kernel = functools.partial(_mmoe_kernel, n_expert=n_expert, n_task=n_task,
                               expert_dim=E, out_lanes=out_lanes)

    out = pl.pallas_call(
        kernel,
        out_shape=jax.ShapeDtypeStruct((B, out_lanes), jnp.float32),
        grid=grid,
        in_specs=[
            pl.BlockSpec((tb, F), lambda i: (i, 0)),          # x: batch-tiled
            pl.BlockSpec((F, he + ng), lambda i: (0, 0)),     # fused weights (invariant)
            pl.BlockSpec((1, he + ng), lambda i: (0, 0)),     # fused f32 bias (invariant)
        ],
        out_specs=pl.BlockSpec((tb, out_lanes), lambda i: (i, 0)),
        compiler_params=pltpu.CompilerParams(
            dimension_semantics=("parallel",)),
    )(x, w_fused, b_fused)

    if split_tasks:
        return [out[:, t * E:(t + 1) * E] for t in range(n_task)]
    return out[:, :n_task * E].reshape(B, n_task, E)


def mmoe_reference(x, w_experts, b_experts, w_gates, b_gates):
    """Pure-JAX reference mirroring the PyTorch forward (use_gate=True)."""
    expert = jnp.maximum(
        jnp.einsum("bf,efd->ebd", x, w_experts) + b_experts[:, None, :], 0.0)
    logits = jnp.einsum("bf,tfe->tbe", x, w_gates) + b_gates[:, None, :]
    gate = jax.nn.softmax(logits, axis=-1)
    return jnp.einsum("tbe,ebd->tbd", gate, expert)       # [n_task, B, E]


if __name__ == "__main__":
    # Small, forward-consistent shapes (feature_dim=32, expert_dim=32, 4 experts, 2 tasks).
    B, F, E = 8, 32, 32
    n_expert, n_task = 4, 2

    key = jax.random.PRNGKey(0)
    kx, kwe, kbe, kwg, kbg = jax.random.split(key, 5)

    x = jax.random.normal(kx, (B, F), dtype=jnp.float32)
    w_experts = jax.random.normal(kwe, (n_expert, F, E), dtype=jnp.float32) / jnp.sqrt(F)
    b_experts = jax.random.normal(kbe, (n_expert, E), dtype=jnp.float32) * 0.01
    w_gates = jax.random.normal(kwg, (n_task, F, n_expert), dtype=jnp.float32) / jnp.sqrt(F)
    b_gates = jax.random.normal(kbg, (n_task, n_expert), dtype=jnp.float32) * 0.01

    ref = mmoe_reference(x, w_experts, b_experts, w_gates, b_gates)

    # f32 compute path, list output (matches the PyTorch module's list of towers).
    towers = jax.block_until_ready(
        mmoe_forward(x, w_experts, b_experts, w_gates, b_gates,
                     compute_dtype=jnp.float32))
    assert len(towers) == n_task and all(t.shape == (B, E) for t in towers)
    got = jnp.stack(towers, axis=0)
    assert jnp.allclose(got, ref, atol=1e-2, rtol=1e-2), "f32 mismatch vs reference"

    # Default bf16 fast path (v6e/v7x MXU rate, bandwidth win on v5e), fused output.
    fused = jax.block_until_ready(
        mmoe_forward(x, w_experts, b_experts, w_gates, b_gates,
                     split_tasks=False))                    # [B, n_task, E]
    assert fused.shape == (B, n_task, E)
    got_bf16 = jnp.transpose(fused, (1, 0, 2))
    assert jnp.allclose(got_bf16, ref, atol=1e-1, rtol=1e-1), "bf16 mismatch vs reference"

    print("KERNEL_OK")
</pallas_src>

<mosaic_0001>
module attributes {stable_mosaic.version = 11 : i64} {
  func.func @_mmoe_kernel(%arg0: i32, %arg1: memref<8x32xf32, #tpu.memory_space<vmem>>, %arg2: memref<32x136xf32, #tpu.memory_space<vmem>>, %arg3: memref<1x136xf32, #tpu.memory_space<vmem>>, %arg4: memref<8x128xf32, #tpu.memory_space<vmem>>) attributes {dimension_semantics = [#tpu.dimension_semantics<parallel>], iteration_bounds = array<i64: 1>, scalar_prefetch = 0 : i64, scratch_operands = 0 : i64, tpu.core_type = #tpu.core_type<tc>, window_params = [{transform_indices = @transform_0, window_bounds = array<i64: 8, 32>}, {pipeline_mode = #tpu.pipeline_mode<synchronous>, transform_indices = @transform_1, window_bounds = array<i64: 32, 136>}, {pipeline_mode = #tpu.pipeline_mode<synchronous>, transform_indices = @transform_2, window_bounds = array<i64: 1, 136>}, {transform_indices = @transform_3, window_bounds = array<i64: 8, 128>}]} {
    %c0 = arith.constant 0 : index
    %c0_0 = arith.constant 0 : index
    %0 = vector.load %arg1[%c0, %c0_0] : memref<8x32xf32, #tpu.memory_space<vmem>>, vector<8x32xf32>
    %c0_1 = arith.constant 0 : index
    %c0_2 = arith.constant 0 : index
    %1 = vector.load %arg2[%c0_1, %c0_2] : memref<32x136xf32, #tpu.memory_space<vmem>>, vector<32x136xf32>
    %cst = arith.constant dense<0.000000e+00> : vector<8x136xf32>
    %2 = tpu.matmul %0, %1, %cst {dimension_numbers = #tpu.dot_dimension_numbers<[1], [0], [0], [1], [0, 0, 1, 1], [], []>} : vector<8x32xf32>, vector<32x136xf32>, vector<8x136xf32> -> vector<8x136xf32>
    %c0_3 = arith.constant 0 : index
    %c0_4 = arith.constant 0 : index
    %3 = vector.load %arg3[%c0_3, %c0_4] : memref<1x136xf32, #tpu.memory_space<vmem>>, vector<1x136xf32>
    %4 = vector.broadcast %3 : vector<1x136xf32> to vector<8x136xf32>
    %5 = arith.addf %2, %4 : vector<8x136xf32>
    %6 = vector.extract_strided_slice %5 {offsets = [0, 0], sizes = [8, 128], strides = [1, 1]} : vector<8x136xf32> to vector<8x128xf32>
    %cst_5 = arith.constant 0.000000e+00 : f32
    %7 = vector.broadcast %cst_5 : f32 to vector<8x128xf32>
    %8 = arith.maximumf %6, %7 : vector<8x128xf32>
    %9 = tpu.iota {dimensions = array<i32: 0>} : vector<4x128xi32>
    %10 = tpu.iota {dimensions = array<i32: 1>} : vector<4x128xi32>
    %c32_i32 = arith.constant 32 : i32
    %11 = vector.broadcast %c32_i32 : i32 to vector<4x128xi32>
    %12 = arith.muli %9, %11 : vector<4x128xi32>
    %13 = arith.cmpi sge, %10, %12 : vector<4x128xi32>
    %c1_i32 = arith.constant 1 : i32
    %14 = vector.broadcast %c1_i32 : i32 to vector<4x128xi32>
    %15 = arith.addi %9, %14 : vector<4x128xi32>
    %c32_i32_6 = arith.constant 32 : i32
    %16 = vector.broadcast %c32_i32_6 : i32 to vector<4x128xi32>
    %17 = arith.muli %15, %16 : vector<4x128xi32>
    %18 = arith.cmpi slt, %10, %17 : vector<4x128xi32>
    %19 = arith.andi %13, %18 : vector<4x128xi1>
    %20 = arith.extui %19 : vector<4x128xi1> to vector<4x128xi32>
    %21 = arith.sitofp %20 : vector<4x128xi32> to vector<4x128xf32>
    %22 = tpu.iota {dimensions = array<i32: 0>} : vector<128x128xi32>
    %23 = tpu.iota {dimensions = array<i32: 1>} : vector<128x128xi32>
    %cst_7 = arith.constant 0.000000e+00 : f32
    %24 = vector.broadcast %cst_7 : f32 to vector<8x128xf32>
    %25 = vector.extract_strided_slice %5 {offsets = [0, 128], sizes = [8, 4], strides = [1, 1]} : vector<8x136xf32> to vector<8x4xf32>
    %cst_8 = arith.constant dense<0xFF800000> : vector<8xf32>
    %26 = vector.multi_reduction <maximumf>, %25, %cst_8 [1] : vector<8x4xf32> to vector<8xf32>
    %27 = vector.shape_cast %26 : vector<8xf32> to vector<8x1xf32>
    %28 = vector.broadcast %27 : vector<8x1xf32> to vector<8x4xf32>
    %29 = arith.subf %25, %28 : vector<8x4xf32>
    %30 = math.exp %29 : vector<8x4xf32>
    %cst_9 = arith.constant dense<0.000000e+00> : vector<8xf32>
    %31 = vector.multi_reduction <add>, %30, %cst_9 [1] : vector<8x4xf32> to vector<8xf32>
    %32 = vector.shape_cast %31 : vector<8xf32> to vector<8x1xf32>
    %33 = vector.broadcast %32 : vector<8x1xf32> to vector<8x4xf32>
    %34 = arith.divf %30, %33 : vector<8x4xf32>
    %cst_10 = arith.constant dense<0.000000e+00> : vector<8x128xf32>
    %35 = tpu.matmul %34, %21, %cst_10 {dimension_numbers = #tpu.dot_dimension_numbers<[1], [0], [0], [1], [0, 0, 1, 1], [], []>} : vector<8x4xf32>, vector<4x128xf32>, vector<8x128xf32> -> vector<8x128xf32>
    %cst_11 = arith.constant 0.000000e+00 : f32
    %36 = vector.broadcast %cst_11 : f32 to vector<128x128xf32>
    %c0_i32 = arith.constant 0 : i32
    %37 = vector.broadcast %c0_i32 : i32 to vector<128x128xi32>
    %38 = arith.cmpi sge, %22, %37 : vector<128x128xi32>
    %c32_i32_12 = arith.constant 32 : i32
    %39 = vector.broadcast %c32_i32_12 : i32 to vector<128x128xi32>
    %40 = arith.cmpi slt, %22, %39 : vector<128x128xi32>
    %41 = arith.andi %38, %40 : vector<128x128xi1>
    %42 = arith.subi %22, %23 : vector<128x128xi32>
    %c0_i32_13 = arith.constant 0 : i32
    %43 = vector.broadcast %c0_i32_13 : i32 to vector<128x128xi32>
    %44 = arith.cmpi eq, %42, %43 : vector<128x128xi32>
    %45 = arith.andi %41, %44 : vector<128x128xi1>
    %46 = arith.extui %45 : vector<128x128xi1> to vector<128x128xi32>
    %47 = arith.sitofp %46 : vector<128x128xi32> to vector<128x128xf32>
    %48 = arith.addf %36, %47 : vector<128x128xf32>
    %c32_i32_14 = arith.constant 32 : i32
    %49 = vector.broadcast %c32_i32_14 : i32 to vector<128x128xi32>
    %50 = arith.cmpi sge, %22, %49 : vector<128x128xi32>
    %c64_i32 = arith.constant 64 : i32
    %51 = vector.broadcast %c64_i32 : i32 to vector<128x128xi32>
    %52 = arith.cmpi slt, %22, %51 : vector<128x128xi32>
    %53 = arith.andi %50, %52 : vector<128x128xi1>
    %54 = arith.subi %22, %23 : vector<128x128xi32>
    %c32_i32_15 = arith.constant 32 : i32
    %55 = vector.broadcast %c32_i32_15 : i32 to vector<128x128xi32>
    %56 = arith.cmpi eq, %54, %55 : vector<128x128xi32>
    %57 = arith.andi %53, %56 : vector<128x128xi1>
    %58 = arith.extui %57 : vector<128x128xi1> to vector<128x128xi32>
    %59 = arith.sitofp %58 : vector<128x128xi32> to vector<128x128xf32>
    %60 = arith.addf %48, %59 : vector<128x128xf32>
    %c64_i32_16 = arith.constant 64 : i32
    %61 = vector.broadcast %c64_i32_16 : i32 to vector<128x128xi32>
    %62 = arith.cmpi sge, %22, %61 : vector<128x128xi32>
    %c96_i32 = arith.constant 96 : i32
    %63 = vector.broadcast %c96_i32 : i32 to vector<128x128xi32>
    %64 = arith.cmpi slt, %22, %63 : vector<128x128xi32>
    %65 = arith.andi %62, %64 : vector<128x128xi1>
    %66 = arith.subi %22, %23 : vector<128x128xi32>
    %c64_i32_17 = arith.constant 64 : i32
    %67 = vector.broadcast %c64_i32_17 : i32 to vector<128x128xi32>
    %68 = arith.cmpi eq, %66, %67 : vector<128x128xi32>
    %69 = arith.andi %65, %68 : vector<128x128xi1>
    %70 = arith.extui %69 : vector<128x128xi1> to vector<128x128xi32>
    %71 = arith.sitofp %70 : vector<128x128xi32> to vector<128x128xf32>
    %72 = arith.addf %60, %71 : vector<128x128xf32>
    %c96_i32_18 = arith.constant 96 : i32
    %73 = vector.broadcast %c96_i32_18 : i32 to vector<128x128xi32>
    %74 = arith.cmpi sge, %22, %73 : vector<128x128xi32>
    %c128_i32 = arith.constant 128 : i32
    %75 = vector.broadcast %c128_i32 : i32 to vector<128x128xi32>
    %76 = arith.cmpi slt, %22, %75 : vector<128x128xi32>
    %77 = arith.andi %74, %76 : vector<128x128xi1>
    %78 = arith.subi %22, %23 : vector<128x128xi32>
    %c96_i32_19 = arith.constant 96 : i32
    %79 = vector.broadcast %c96_i32_19 : i32 to vector<128x128xi32>
    %80 = arith.cmpi eq, %78, %79 : vector<128x128xi32>
    %81 = arith.andi %77, %80 : vector<128x128xi1>
    %82 = arith.extui %81 : vector<128x128xi1> to vector<128x128xi32>
    %83 = arith.sitofp %82 : vector<128x128xi32> to vector<128x128xf32>
    %84 = arith.addf %72, %83 : vector<128x128xf32>
    %85 = arith.mulf %35, %8 : vector<8x128xf32>
    %cst_20 = arith.constant dense<0.000000e+00> : vector<8x128xf32>
    %86 = tpu.matmul %85, %84, %cst_20 {dimension_numbers = #tpu.dot_dimension_numbers<[1], [0], [0], [1], [0, 0, 1, 1], [], []>} : vector<8x128xf32>, vector<128x128xf32>, vector<8x128xf32> -> vector<8x128xf32>
    %87 = arith.addf %24, %86 : vector<8x128xf32>
    %88 = vector.extract_strided_slice %5 {offsets = [0, 132], sizes = [8, 4], strides = [1, 1]} : vector<8x136xf32> to vector<8x4xf32>
    %cst_21 = arith.constant dense<0xFF800000> : vector<8xf32>
    %89 = vector.multi_reduction <maximumf>, %88, %cst_21 [1] : vector<8x4xf32> to vector<8xf32>
    %90 = vector.shape_cast %89 : vector<8xf32> to vector<8x1xf32>
    %91 = vector.broadcast %90 : vector<8x1xf32> to vector<8x4xf32>
    %92 = arith.subf %88, %91 : vector<8x4xf32>
    %93 = math.exp %92 : vector<8x4xf32>
    %cst_22 = arith.constant dense<0.000000e+00> : vector<8xf32>
    %94 = vector.multi_reduction <add>, %93, %cst_22 [1] : vector<8x4xf32> to vector<8xf32>
    %95 = vector.shape_cast %94 : vector<8xf32> to vector<8x1xf32>
    %96 = vector.broadcast %95 : vector<8x1xf32> to vector<8x4xf32>
    %97 = arith.divf %93, %96 : vector<8x4xf32>
    %cst_23 = arith.constant dense<0.000000e+00> : vector<8x128xf32>
    %98 = tpu.matmul %97, %21, %cst_23 {dimension_numbers = #tpu.dot_dimension_numbers<[1], [0], [0], [1], [0, 0, 1, 1], [], []>} : vector<8x4xf32>, vector<4x128xf32>, vector<8x128xf32> -> vector<8x128xf32>
    %cst_24 = arith.constant 0.000000e+00 : f32
    %99 = vector.broadcast %cst_24 : f32 to vector<128x128xf32>
    %c0_i32_25 = arith.constant 0 : i32
    %100 = vector.broadcast %c0_i32_25 : i32 to vector<128x128xi32>
    %101 = arith.cmpi sge, %22, %100 : vector<128x128xi32>
    %c32_i32_26 = arith.constant 32 : i32
    %102 = vector.broadcast %c32_i32_26 : i32 to vector<128x128xi32>
    %103 = arith.cmpi slt, %22, %102 : vector<128x128xi32>
    %104 = arith.andi %101, %103 : vector<128x128xi1>
    %105 = arith.subi %22, %23 : vector<128x128xi32>
    %c-32_i32 = arith.constant -32 : i32
    %106 = vector.broadcast %c-32_i32 : i32 to vector<128x128xi32>
    %107 = arith.cmpi eq, %105, %106 : vector<128x128xi32>
    %108 = arith.andi %104, %107 : vector<128x128xi1>
    %109 = arith.extui %108 : vector<128x128xi1> to vector<128x128xi32>
    %110 = arith.sitofp %109 : vector<128x128xi32> to vector<128x128xf32>
    %111 = arith.addf %99, %110 : vector<128x128xf32>
    %c32_i32_27 = arith.constant 32 : i32
    %112 = vector.broadcast %c32_i32_27 : i32 to vector<128x128xi32>
    %113 = arith.cmpi sge, %22, %112 : vector<128x128xi32>
    %c64_i32_28 = arith.constant 64 : i32
    %114 = vector.broadcast %c64_i32_28 : i32 to vector<128x128xi32>
    %115 = arith.cmpi slt, %22, %114 : vector<128x128xi32>
    %116 = arith.andi %113, %115 : vector<128x128xi1>
    %117 = arith.subi %22, %23 : vector<128x128xi32>
    %c0_i32_29 = arith.constant 0 : i32
    %118 = vector.broadcast %c0_i32_29 : i32 to vector<128x128xi32>
    %119 = arith.cmpi eq, %117, %118 : vector<128x128xi32>
    %120 = arith.andi %116, %119 : vector<128x128xi1>
    %121 = arith.extui %120 : vector<128x128xi1> to vector<128x128xi32>
    %122 = arith.sitofp %121 : vector<128x128xi32> to vector<128x128xf32>
    %123 = arith.addf %111, %122 : vector<128x128xf32>
    %c64_i32_30 = arith.constant 64 : i32
    %124 = vector.broadcast %c64_i32_30 : i32 to vector<128x128xi32>
    %125 = arith.cmpi sge, %22, %124 : vector<128x128xi32>
    %c96_i32_31 = arith.constant 96 : i32
    %126 = vector.broadcast %c96_i32_31 : i32 to vector<128x128xi32>
    %127 = arith.cmpi slt, %22, %126 : vector<128x128xi32>
    %128 = arith.andi %125, %127 : vector<128x128xi1>
    %129 = arith.subi %22, %23 : vector<128x128xi32>
    %c32_i32_32 = arith.constant 32 : i32
    %130 = vector.broadcast %c32_i32_32 : i32 to vector<128x128xi32>
    %131 = arith.cmpi eq, %129, %130 : vector<128x128xi32>
    %132 = arith.andi %128, %131 : vector<128x128xi1>
    %133 = arith.extui %132 : vector<128x128xi1> to vector<128x128xi32>
    %134 = arith.sitofp %133 : vector<128x128xi32> to vector<128x128xf32>
    %135 = arith.addf %123, %134 : vector<128x128xf32>
    %c96_i32_33 = arith.constant 96 : i32
    %136 = vector.broadcast %c96_i32_33 : i32 to vector<128x128xi32>
    %137 = arith.cmpi sge, %22, %136 : vector<128x128xi32>
    %c128_i32_34 = arith.constant 128 : i32
    %138 = vector.broadcast %c128_i32_34 : i32 to vector<128x128xi32>
    %139 = arith.cmpi slt, %22, %138 : vector<128x128xi32>
    %140 = arith.andi %137, %139 : vector<128x128xi1>
    %141 = arith.subi %22, %23 : vector<128x128xi32>
    %c64_i32_35 = arith.constant 64 : i32
    %142 = vector.broadcast %c64_i32_35 : i32 to vector<128x128xi32>
    %143 = arith.cmpi eq, %141, %142 : vector<128x128xi32>
    %144 = arith.andi %140, %143 : vector<128x128xi1>
    %145 = arith.extui %144 : vector<128x128xi1> to vector<128x128xi32>
    %146 = arith.sitofp %145 : vector<128x128xi32> to vector<128x128xf32>
    %147 = arith.addf %135, %146 : vector<128x128xf32>
    %148 = arith.mulf %98, %8 : vector<8x128xf32>
    %cst_36 = arith.constant dense<0.000000e+00> : vector<8x128xf32>
    %149 = tpu.matmul %148, %147, %cst_36 {dimension_numbers = #tpu.dot_dimension_numbers<[1], [0], [0], [1], [0, 0, 1, 1], [], []>} : vector<8x128xf32>, vector<128x128xf32>, vector<8x128xf32> -> vector<8x128xf32>
    %150 = arith.addf %87, %149 : vector<8x128xf32>
    %c0_37 = arith.constant 0 : index
    %c0_38 = arith.constant 0 : index
    %151 = vector.load %arg4[%c0_37, %c0_38] : memref<8x128xf32, #tpu.memory_space<vmem>>, vector<8x128xf32>
    tpu.vector_store %arg4[%c0_37, %c0_38], %150 {strides = array<i32>} : memref<8x128xf32, #tpu.memory_space<vmem>>, vector<8x128xf32>,
    return
  }
  func.func @transform_0(%arg0: i32) -> (i32, i32) {
    %c0_i32 = arith.constant 0 : i32
    %c0_i32_0 = arith.constant 0 : i32
    return %arg0, %c0_i32 : i32, i32
  }
  func.func @transform_1(%arg0: i32) -> (i32, i32) {
    %c0_i32 = arith.constant 0 : i32
    %c0_i32_0 = arith.constant 0 : i32
    %c0_i32_1 = arith.constant 0 : i32
    return %c0_i32, %c0_i32_0 : i32, i32
  }
  func.func @transform_2(%arg0: i32) -> (i32, i32) {
    %c0_i32 = arith.constant 0 : i32
    %c0_i32_0 = arith.constant 0 : i32
    %c0_i32_1 = arith.constant 0 : i32
    return %c0_i32, %c0_i32_0 : i32, i32
  }
  func.func @transform_3(%arg0: i32) -> (i32, i32) {
    %c0_i32 = arith.constant 0 : i32
    %c0_i32_0 = arith.constant 0 : i32
    return %arg0, %c0_i32 : i32, i32
  }
}

</mosaic_0001>

<llo_original>
// kernel: mmoe_forward.1
$region0: #{mmoe_forward.1}
  #allocation0 [shape = 'u32[]', space=smem, size = 0x4, offset = 0x4, fixed_abs, tag = 'smem constant byte address 0x4 - core index']
  #allocation1 [shape = 'u32[72,128]{1,0:T(1,128)}', space=vmem, size = 0x9000, scoped, tag = 'internal scratch']
  %s0 = inlined_call_operand.vmem [shape: f32[8,32], index: 0, kind: input, shape index: {}]
  %s1 = inlined_call_operand.vmem [shape: f32[32,136], index: 1, kind: input, shape index: {}]
  %s2 = inlined_call_operand.vmem [shape: f32[1,136], index: 2, kind: input, shape index: {}]
  %s3 = inlined_call_operand.vmem [shape: f32[8,128], index: 3, kind: output, shape index: {}]
  %s4 = sld [smem:[#allocation0]]
  $region22: #{mmoe_forward.1} parent=0
    _
  %s6 = ssub.s32 1, %s4
  %s7 = scalar_select 0, %s6, %s4
  // Predicated region
  $region2: #{mmoe_forward.1} parent=0 // pred_check
    _
  $region3: #{mmoe_forward.1} parent=0 // pred_check_branch
    %9 = sbr.rel (0) target = $region5
  $region4: #{mmoe_forward.1} parent=0 // pred_region
    _
  $region5: #{mmoe_forward.1} parent=0 // pred_fallthru
    _
  // Predicated region
  $region6: #{mmoe_forward.1} parent=0 // pred_check
    _
  $region7: #{mmoe_forward.1} parent=0 // pred_check_branch
    %11 = sbr.rel (0) target = $region9
  $region8: #{mmoe_forward.1} parent=0 // pred_region
    _
  $region9: #{mmoe_forward.1} parent=0 // pred_fallthru
    _
  // Predicated region
  $region10: #{mmoe_forward.1} parent=0 // pred_check
    _
  $region11: #{mmoe_forward.1} parent=0 // pred_check_branch
    %13 = sbr.rel (0) target = $region13
  $region12: #{mmoe_forward.1} parent=0 // pred_region
    _
  $region13: #{mmoe_forward.1} parent=0 // pred_fallthru
    _
  %v14 = vld [vmem:[%s0] sm:$0xff]
  %v15 = vld [vmem:[%s1] sm:$0xff]
  %v16 = vld [vmem:[%s1 + $0x8] sm:$0xff]
  %v17 = vld [vmem:[%s1 + $0x10] sm:$0xff]
  %v18 = vld [vmem:[%s1 + $0x18] sm:$0xff]
  %v19 = vld [vmem:[%s1 + $0x20] sm:$0xff]
  %v20 = vld [vmem:[%s1 + $0x28] sm:$0xff]
  %v21 = vld [vmem:[%s1 + $0x30] sm:$0xff]
  %v22 = vld [vmem:[%s1 + $0x38] sm:$0xff]
  %v23 = vld [vmem:[%s2] sm:$0x3]
  %v25 = vperm.slane %v23, 0
  %v26 = vperm.slane %v23, 1
  %vm29 = vcmask 261120
  %v31 = vsel %vm29, %v14, 0
  %33 = vmatpush.msra.mxu0 0.0
  %34 = vmatpush.msra.mxu0 0.0
  %35 = vmatpush.msra.mxu0 0.0
  %36 = vmatpush.msra.mxu0 0.0
  %37 = vmatpush.msra.mxu0 0.0
  %38 = vmatpush.msra.mxu0 0.0
  %39 = vmatpush.msra.mxu0 0.0
  %40 = vmatpush.msra.mxu0 0.0
  %41 = vmatpush.msra.mxu0 0.0
  %42 = vmatpush.msra.mxu0 0.0
  %43 = vmatpush.msra.mxu0 0.0
  %44 = vmatpush.msra.mxu0 0.0
  %45 = vmatpush.msra.mxu0 %v21
  %46 = vmatpush.msra.mxu0 %v19
  %47 = vmatpush.msra.mxu0 %v17
  %48 = vmatpush.msra.mxu0 %v15
  %49 = vmatmul.f32.gmra.mxu0 %v31
  %v50 = vpop.f32.mrf.mxu0
  %v51 = vadd.f32 %v25, %v50
  %52 = vdwg.mxu0
  %53 = vmatpush.msra.mxu0 0.0
  %54 = vmatpush.msra.mxu0 0.0
  %55 = vmatpush.msra.mxu0 0.0
  %56 = vmatpush.msra.mxu0 0.0
  %57 = vmatpush.msra.mxu0 0.0
  %58 = vmatpush.msra.mxu0 0.0
  %59 = vmatpush.msra.mxu0 0.0
  %60 = vmatpush.msra.mxu0 0.0
  %61 = vmatpush.msra.mxu0 0.0
  %62 = vmatpush.msra.mxu0 0.0
  %63 = vmatpush.msra.mxu0 0.0
  %64 = vmatpush.msra.mxu0 0.0
  %65 = vmatpush.msra.mxu0 %v22
  %66 = vmatpush.msra.mxu0 %v20
  %67 = vmatpush.msra.mxu0 %v18
  %68 = vmatpush.msra.mxu0 %v16
  %69 = vmatmul.f32.gmra.mxu0 %v31
  %v70 = vpop.f32.mrf.mxu0
  %v71 = vadd.f32 %v26, %v70
  %72 = vdwg.mxu0
  %v73 = vmax.f32 %v51, 0.0
  %v74 = vlaneseq
  %v75 = vshrl.u32 %v74, 7
  %v76 = vlaneseq
  %v77 = vand.u32 %v76, 127
  %v78 = vmul.u32 %v75, 32
  %vm79 = vcmp.ge.s32.totalorder %v77, %v78
  %v80 = vadd.s32 %v75, 1
  %v81 = vmul.u32 %v80, 32
  %vm82 = vcmp.lt.s32.totalorder %v77, %v81
  %vm83 = vmand %vm79, %vm82
  %v84 = vsel %vm83, 1, 0
  %v85 = vcvt.s32.f32 %v84
  %v86 = vadd.s32 %v75, 8
  %v87 = vadd.s32 %v75, 16
  %v88 = vadd.s32 %v75, 24
  %v89 = vadd.s32 %v75, 32
  %v90 = vadd.s32 %v75, 40
  %v91 = vadd.s32 %v75, 48
  %v92 = vadd.s32 %v75, 56
  %v93 = vadd.s32 %v75, 64
  %v94 = vadd.s32 %v75, 72
  %v95 = vadd.s32 %v75, 80
  %v96 = vadd.s32 %v75, 88
  %v97 = vadd.s32 %v75, 96
  %v98 = vadd.s32 %v75, 104
  %v99 = vadd.s32 %v75, 112
  %v100 = vadd.s32 %v75, 120
  %vm101 = vcmask 31744
  %v102 = vsel %vm101, %v71, -inf
  %103 = vmax.xlane.f32.xlu0 %v102
  %v104 = vpop.xlane.xlu0 %103
  %v105 = vsub.f32 %v71, %v104
  %v106 = vmul.f32 %v105, 1.442695
  %v107 = vpow.pop %v106
  %v108 = vsel %vm101, %v107, 0.0
  %109 = vadd.xlane.f32.xlu0 %v108
  %v110 = vpop.xlane.xlu0 %109
  %v111 = vrcp.pop %v110
  %v112 = vmul.f32 %v110, %v111
  %v113 = vsub.f32 1.0, %v112
  %v114 = vmul.f32 %v111, %v113
  %v115 = vadd.f32 %v111, %v114
  %vm116 = vweird.f32 %v110
  %vm117 = vweird.f32 %v111
  %vm118 = vmor %vm116, %vm117
  %v119 = vsel %vm118, %v111, %v115
  %v120 = vand.u32 2147483647, %v110
  %vm121 = vcmp.eq.f32.partialorder %v120, 8.507059e+37
  %v122 = vand.u32 %v110, 2147483648
  %v123 = vor.u32 1.1754944e-38, %v122
  %v124 = vsel %vm121, %v123, %v119
  %v125 = vmul.f32 %v107, %v124
  %v127 = vsel %vm101, %v125, 0
  %vm129 = vcmask 1043456
  %v131 = vsel %vm129, %v85, 0
  %133 = vmatpush.msra.mxu0 0.0
  %134 = vmatpush.msra.mxu0 0.0
  %135 = vmatpush.msra.mxu0 0.0
  %136 = vmatpush.msra.mxu0 0.0
  %137 = vmatpush.msra.mxu0 0.0
  %138 = vmatpush.msra.mxu0 0.0
  %139 = vmatpush.msra.mxu0 0.0
  %140 = vmatpush.msra.mxu0 0.0
  %141 = vmatpush.msra.mxu0 0.0
  %142 = vmatpush.msra.mxu0 0.0
  %143 = vmatpush.msra.mxu0 0.0
  %144 = vmatpush.msra.mxu0 0.0
  %145 = vmatpush.msra.mxu0 0.0
  %146 = vmatpush.msra.mxu0 0.0
  %147 = vmatpush.msra.mxu0 0.0
  %148 = vmatpush.msra.mxu0 %v131
  %149 = vmatmul.f32.gmra.mxu0 %v127
  %v150 = vpop.f32.mrf.mxu0
  %v151 = vadd.f32 0.0, %v150
  %152 = vdwg.mxu0
  %vm153 = vcmp.ge.s32.totalorder %v75, 0
  %vm154 = vcmp.ge.s32.totalorder %v86, 0
  %vm155 = vcmp.ge.s32.totalorder %v87, 0
  %vm156 = vcmp.ge.s32.totalorder %v88, 0
  %vm157 = vcmp.ge.s32.totalorder %v89, 0
  %vm158 = vcmp.ge.s32.totalorder %v90, 0
  %vm159 = vcmp.ge.s32.totalorder %v91, 0
  %vm160 = vcmp.ge.s32.totalorder %v92, 0
  %vm161 = vcmp.ge.s32.totalorder %v93, 0
  %vm162 = vcmp.ge.s32.totalorder %v94, 0
  %vm163 = vcmp.ge.s32.totalorder %v95, 0
  %vm164 = vcmp.ge.s32.totalorder %v96, 0
  %vm165 = vcmp.ge.s32.totalorder %v97, 0
  %vm166 = vcmp.ge.s32.totalorder %v98, 0
  %vm167 = vcmp.ge.s32.totalorder %v99, 0
  %vm168 = vcmp.ge.s32.totalorder %v100, 0
  %vm169 = vcmp.lt.s32.totalorder %v75, 32
  %vm170 = vcmp.lt.s32.totalorder %v86, 32
  %vm171 = vcmp.lt.s32.totalorder %v87, 32
  %vm172 = vcmp.lt.s32.totalorder %v88, 32
  %vm173 = vcmp.lt.s32.totalorder %v89, 32
  %vm174 = vcmp.lt.s32.totalorder %v90, 32
  %vm175 = vcmp.lt.s32.totalorder %v91, 32
  %vm176 = vcmp.lt.s32.totalorder %v92, 32
  %vm177 = vcmp.lt.s32.totalorder %v93, 32
  %vm178 = vcmp.lt.s32.totalorder %v94, 32
  %vm179 = vcmp.lt.s32.totalorder %v95, 32
  %vm180 = vcmp.lt.s32.totalorder %v96, 32
  %vm181 = vcmp.lt.s32.totalorder %v97, 32
  %vm182 = vcmp.lt.s32.totalorder %v98, 32
  %vm183 = vcmp.lt.s32.totalorder %v99, 32
  %vm184 = vcmp.lt.s32.totalorder %v100, 32
  %vm185 = vmand %vm153, %vm169
  %vm186 = vmand %vm154, %vm170
  %vm187 = vmand %vm155, %vm171
  %vm188 = vmand %vm156, %vm172
  %vm189 = vmand %vm157, %vm173
  %vm190 = vmand %vm158, %vm174
  %vm191 = vmand %vm159, %vm175
  %vm192 = vmand %vm160, %vm176
  %vm193 = vmand %vm161, %vm177
  %vm194 = vmand %vm162, %vm178
  %vm195 = vmand %vm163, %vm179
  %vm196 = vmand %vm164, %vm180
  %vm197 = vmand %vm165, %vm181
  %vm198 = vmand %vm166, %vm182
  %vm199 = vmand %vm167, %vm183
  %vm200 = vmand %vm168, %vm184
  %v201 = vsub.s32 %v75, %v77
  %v202 = vsub.s32 %v86, %v77
  %v203 = vsub.s32 %v87, %v77
  %v204 = vsub.s32 %v88, %v77
  %v205 = vsub.s32 %v89, %v77
  %v206 = vsub.s32 %v90, %v77
  %v207 = vsub.s32 %v91, %v77
  %v208 = vsub.s32 %v92, %v77
  %v209 = vsub.s32 %v93, %v77
  %v210 = vsub.s32 %v94, %v77
  %v211 = vsub.s32 %v95, %v77
  %v212 = vsub.s32 %v96, %v77
  %v213 = vsub.s32 %v97, %v77
  %v214 = vsub.s32 %v98, %v77
  %v215 = vsub.s32 %v99, %v77
  %v216 = vsub.s32 %v100, %v77
  %vm217 = vcmp.eq.s32.totalorder %v201, 0
  %vm218 = vcmp.eq.s32.totalorder %v202, 0
  %vm219 = vcmp.eq.s32.totalorder %v203, 0
  %vm220 = vcmp.eq.s32.totalorder %v204, 0
  %vm221 = vcmp.eq.s32.totalorder %v205, 0
  %vm222 = vcmp.eq.s32.totalorder %v206, 0
  %vm223 = vcmp.eq.s32.totalorder %v207, 0
  %vm224 = vcmp.eq.s32.totalorder %v208, 0
  %vm225 = vcmp.eq.s32.totalorder %v209, 0
  %vm226 = vcmp.eq.s32.totalorder %v210, 0
  %vm227 = vcmp.eq.s32.totalorder %v211, 0
  %vm228 = vcmp.eq.s32.totalorder %v212, 0
  %vm229 = vcmp.eq.s32.totalorder %v213, 0
  %vm230 = vcmp.eq.s32.totalorder %v214, 0
  %vm231 = vcmp.eq.s32.totalorder %v215, 0
  %vm232 = vcmp.eq.s32.totalorder %v216, 0
  %vm233 = vmand %vm185, %vm217
  %vm234 = vmand %vm186, %vm218
  %vm235 = vmand %vm187, %vm219
  %vm236 = vmand %vm188, %vm220
  %vm237 = vmand %vm189, %vm221
  %vm238 = vmand %vm190, %vm222
  %vm239 = vmand %vm191, %vm223
  %vm240 = vmand %vm192, %vm224
  %vm241 = vmand %vm193, %vm225
  %vm242 = vmand %vm194, %vm226
  %vm243 = vmand %vm195, %vm227
  %vm244 = vmand %vm196, %vm228
  %vm245 = vmand %vm197, %vm229
  %vm246 = vmand %vm198, %vm230
  %vm247 = vmand %vm199, %vm231
  %vm248 = vmand %vm200, %vm232
  %v249 = vsel %vm233, 1, 0
  %v250 = vsel %vm234, 1, 0
  %v251 = vsel %vm235, 1, 0
  %v252 = vsel %vm236, 1, 0
  %v253 = vsel %vm237, 1, 0
  %v254 = vsel %vm238, 1, 0
  %v255 = vsel %vm239, 1, 0
  %v256 = vsel %vm240, 1, 0
  %v257 = vsel %vm241, 1, 0
  %v258 = vsel %vm242, 1, 0
  %v259 = vsel %vm243, 1, 0
  %v260 = vsel %vm244, 1, 0
  %v261 = vsel %vm245, 1, 0
  %v262 = vsel %vm246, 1, 0
  %v263 = vsel %vm247, 1, 0
  %v264 = vsel %vm248, 1, 0
  %v265 = vcvt.s32.f32 %v249
  %v266 = vcvt.s32.f32 %v250
  %v267 = vcvt.s32.f32 %v251
  %v268 = vcvt.s32.f32 %v252
  %v269 = vcvt.s32.f32 %v253
  %v270 = vcvt.s32.f32 %v254
  %v271 = vcvt.s32.f32 %v255
  %v272 = vcvt.s32.f32 %v256
  %v273 = vcvt.s32.f32 %v257
  %v274 = vcvt.s32.f32 %v258
  %v275 = vcvt.s32.f32 %v259
  %v276 = vcvt.s32.f32 %v260
  %v277 = vcvt.s32.f32 %v261
  %v278 = vcvt.s32.f32 %v262
  %v279 = vcvt.s32.f32 %v263
  %v280 = vcvt.s32.f32 %v264
  %v281 = vadd.f32 %v265, 0.0
  %v282 = vadd.f32 %v266, 0.0
  %v283 = vadd.f32 %v267, 0.0
  %v284 = vadd.f32 %v268, 0.0
  %v285 = vadd.f32 %v269, 0.0
  %v286 = vadd.f32 %v270, 0.0
  %v287 = vadd.f32 %v271, 0.0
  %v288 = vadd.f32 %v272, 0.0
  %v289 = vadd.f32 %v273, 0.0
  %v290 = vadd.f32 %v274, 0.0
  %v291 = vadd.f32 %v275, 0.0
  %v292 = vadd.f32 %v276, 0.0
  %v293 = vadd.f32 %v277, 0.0
  %v294 = vadd.f32 %v278, 0.0
  %v295 = vadd.f32 %v279, 0.0
  %v296 = vadd.f32 %v280, 0.0
  %vm297 = vcmp.ge.s32.totalorder %v75, 32
  %vm298 = vcmp.ge.s32.totalorder %v86, 32
  %vm299 = vcmp.ge.s32.totalorder %v87, 32
  %vm300 = vcmp.ge.s32.totalorder %v88, 32
  %vm301 = vcmp.ge.s32.totalorder %v89, 32
  %vm302 = vcmp.ge.s32.totalorder %v90, 32
  %vm303 = vcmp.ge.s32.totalorder %v91, 32
  %vm304 = vcmp.ge.s32.totalorder %v92, 32
  %vm305 = vcmp.ge.s32.totalorder %v93, 32
  %vm306 = vcmp.ge.s32.totalorder %v94, 32
  %vm307 = vcmp.ge.s32.totalorder %v95, 32
  %vm308 = vcmp.ge.s32.totalorder %v96, 32
  %vm309 = vcmp.ge.s32.totalorder %v97, 32
  %vm310 = vcmp.ge.s32.totalorder %v98, 32
  %vm311 = vcmp.ge.s32.totalorder %v99, 32
  %vm312 = vcmp.ge.s32.totalorder %v100, 32
  %vm313 = vcmp.lt.s32.totalorder %v75, 64
  %vm314 = vcmp.lt.s32.totalorder %v86, 64
  %vm315 = vcmp.lt.s32.totalorder %v87, 64
  %vm316 = vcmp.lt.s32.totalorder %v88, 64
  %vm317 = vcmp.lt.s32.totalorder %v89, 64
  %vm318 = vcmp.lt.s32.totalorder %v90, 64
  %vm319 = vcmp.lt.s32.totalorder %v91, 64
  %vm320 = vcmp.lt.s32.totalorder %v92, 64
  %vm321 = vcmp.lt.s32.totalorder %v93, 64
  %vm322 = vcmp.lt.s32.totalorder %v94, 64
  %vm323 = vcmp.lt.s32.totalorder %v95, 64
  %vm324 = vcmp.lt.s32.totalorder %v96, 64
  %vm325 = vcmp.lt.s32.totalorder %v97, 64
  %vm326 = vcmp.lt.s32.totalorder %v98, 64
  %vm327 = vcmp.lt.s32.totalorder %v99, 64
  %vm328 = vcmp.lt.s32.totalorder %v100, 64
  %vm329 = vmand %vm297, %vm313
  %vm330 = vmand %vm298, %vm314
  %vm331 = vmand %vm299, %vm315
  %vm332 = vmand %vm300, %vm316
  %vm333 = vmand %vm301, %vm317
  %vm334 = vmand %vm302, %vm318
  %vm335 = vmand %vm303, %vm319
  %vm336 = vmand %vm304, %vm320
  %vm337 = vmand %vm305, %vm321
  %vm338 = vmand %vm306, %vm322
  %vm339 = vmand %vm307, %vm323
  %vm340 = vmand %vm308, %vm324
  %vm341 = vmand %vm309, %vm325
  %vm342 = vmand %vm310, %vm326
  %vm343 = vmand %vm311, %vm327
  %vm344 = vmand %vm312, %vm328
  %vm345 = vcmp.eq.s32.totalorder %v201, 32
  %vm346 = vcmp.eq.s32.totalorder %v202, 32
  %vm347 = vcmp.eq.s32.totalorder %v203, 32
  %vm348 = vcmp.eq.s32.totalorder %v204, 32
  %vm349 = vcmp.eq.s32.totalorder %v205, 32
  %vm350 = vcmp.eq.s32.totalorder %v206, 32
  %vm351 = vcmp.eq.s32.totalorder %v207, 32
  %vm352 = vcmp.eq.s32.totalorder %v208, 32
  %vm353 = vcmp.eq.s32.totalorder %v209, 32
  %vm354 = vcmp.eq.s32.totalorder %v210, 32
  %vm355 = vcmp.eq.s32.totalorder %v211, 32
  %vm356 = vcmp.eq.s32.totalorder %v212, 32
  %vm357 = vcmp.eq.s32.totalorder %v213, 32
  %vm358 = vcmp.eq.s32.totalorder %v214, 32
  %vm359 = vcmp.eq.s32.totalorder %v215, 32
  %vm360 = vcmp.eq.s32.totalorder %v216, 32
  %vm361 = vmand %vm329, %vm345
  %vm362 = vmand %vm330, %vm346
  %vm363 = vmand %vm331, %vm347
  %vm364 = vmand %vm332, %vm348
  %vm365 = vmand %vm333, %vm349
  %vm366 = vmand %vm334, %vm350
  %vm367 = vmand %vm335, %vm351
  %vm368 = vmand %vm336, %vm352
  %vm369 = vmand %vm337, %vm353
  %vm370 = vmand %vm338, %vm354
  %vm371 = vmand %vm339, %vm355
  %vm372 = vmand %vm340, %vm356
  %vm373 = vmand %vm341, %vm357
  %vm374 = vmand %vm342, %vm358
  %vm375 = vmand %vm343, %vm359
  %vm376 = vmand %vm344, %vm360
  %v377 = vsel %vm361, 1, 0
  %v378 = vsel %vm362, 1, 0
  %v379 = vsel %vm363, 1, 0
  %v380 = vsel %vm364, 1, 0
  %v381 = vsel %vm365, 1, 0
  %v382 = vsel %vm366, 1, 0
  %v383 = vsel %vm367, 1, 0
  %v384 = vsel %vm368, 1, 0
  %v385 = vsel %vm369, 1, 0
  %v386 = vsel %vm370, 1, 0
  %v387 = vsel %vm371, 1, 0
  %v388 = vsel %vm372, 1, 0
  %v389 = vsel %vm373, 1, 0
  %v390 = vsel %vm374, 1, 0
  %v391 = vsel %vm375, 1, 0
  %v392 = vsel %vm376, 1, 0
  %v393 = vcvt.s32.f32 %v377
  %v394 = vcvt.s32.f32 %v378
  %v395 = vcvt.s32.f32 %v379
  %v396 = vcvt.s32.f32 %v380
  %v397 = vcvt.s32.f32 %v381
  %v398 = vcvt.s32.f32 %v382
  %v399 = vcvt.s32.f32 %v383
  %v400 = vcvt.s32.f32 %v384
  %v401 = vcvt.s32.f32 %v385
  %v402 = vcvt.s32.f32 %v386
  %v403 = vcvt.s32.f32 %v387
  %v404 = vcvt.s32.f32 %v388
  %v405 = vcvt.s32.f32 %v389
  %v406 = vcvt.s32.f32 %v390
  %v407 = vcvt.s32.f32 %v391
  %v408 = vcvt.s32.f32 %v392
  %v409 = vadd.f32 %v281, %v393
  %v410 = vadd.f32 %v282, %v394
  %v411 = vadd.f32 %v283, %v395
  %v412 = vadd.f32 %v284, %v396
  %v413 = vadd.f32 %v285, %v397
  %v414 = vadd.f32 %v286, %v398
  %v415 = vadd.f32 %v287, %v399
  %v416 = vadd.f32 %v288, %v400
  %v417 = vadd.f32 %v289, %v401
  %v418 = vadd.f32 %v290, %v402
  %v419 = vadd.f32 %v291, %v403
  %v420 = vadd.f32 %v292, %v404
  %v421 = vadd.f32 %v293, %v405
  %v422 = vadd.f32 %v294, %v406
  %v423 = vadd.f32 %v295, %v407
  %v424 = vadd.f32 %v296, %v408
  %vm425 = vcmp.ge.s32.totalorder %v75, 64
  %vm426 = vcmp.ge.s32.totalorder %v86, 64
  %vm427 = vcmp.ge.s32.totalorder %v87, 64
  %vm428 = vcmp.ge.s32.totalorder %v88, 64
  %vm429 = vcmp.ge.s32.totalorder %v89, 64
  %vm430 = vcmp.ge.s32.totalorder %v90, 64
  %vm431 = vcmp.ge.s32.totalorder %v91, 64
  %vm432 = vcmp.ge.s32.totalorder %v92, 64
  %vm433 = vcmp.ge.s32.totalorder %v93, 64
  %vm434 = vcmp.ge.s32.totalorder %v94, 64
  %vm435 = vcmp.ge.s32.totalorder %v95, 64
  %vm436 = vcmp.ge.s32.totalorder %v96, 64
  %vm437 = vcmp.ge.s32.totalorder %v97, 64
  %vm438 = vcmp.ge.s32.totalorder %v98, 64
  %vm439 = vcmp.ge.s32.totalorder %v99, 64
  %vm440 = vcmp.ge.s32.totalorder %v100, 64
  %vm441 = vcmp.lt.s32.totalorder %v75, 96
  %vm442 = vcmp.lt.s32.totalorder %v86, 96
  %vm443 = vcmp.lt.s32.totalorder %v87, 96
  %vm444 = vcmp.lt.s32.totalorder %v88, 96
  %vm445 = vcmp.lt.s32.totalorder %v89, 96
  %vm446 = vcmp.lt.s32.totalorder %v90, 96
  %vm447 = vcmp.lt.s32.totalorder %v91, 96
  %vm448 = vcmp.lt.s32.totalorder %v92, 96
  %vm449 = vcmp.lt.s32.totalorder %v93, 96
  %vm450 = vcmp.lt.s32.totalorder %v94, 96
  %vm451 = vcmp.lt.s32.totalorder %v95, 96
  %vm452 = vcmp.lt.s32.totalorder %v96, 96
  %vm453 = vcmp.lt.s32.totalorder %v97, 96
  %vm454 = vcmp.lt.s32.totalorder %v98, 96
  %vm455 = vcmp.lt.s32.totalorder %v99, 96
  %vm456 = vcmp.lt.s32.totalorder %v100, 96
  %vm457 = vmand %vm425, %vm441
  %vm458 = vmand %vm426, %vm442
  %vm459 = vmand %vm427, %vm443
  %vm460 = vmand %vm428, %vm444
  %vm461 = vmand %vm429, %vm445
  %vm462 = vmand %vm430, %vm446
  %vm463 = vmand %vm431, %vm447
  %vm464 = vmand %vm432, %vm448
  %vm465 = vmand %vm433, %vm449
  %vm466 = vmand %vm434, %vm450
  %vm467 = vmand %vm435, %vm451
  %vm468 = vmand %vm436, %vm452
  %vm469 = vmand %vm437, %vm453
  %vm470 = vmand %vm438, %vm454
  %vm471 = vmand %vm439, %vm455
  %vm472 = vmand %vm440, %vm456
  %vm473 = vcmp.eq.s32.totalorder %v201, 64
  %vm474 = vcmp.eq.s32.totalorder %v202, 64
  %vm475 = vcmp.eq.s32.totalorder %v203, 64
  %vm476 = vcmp.eq.s32.totalorder %v204, 64
  %vm477 = vcmp.eq.s32.totalorder %v205, 64
  %vm478 = vcmp.eq.s32.totalorder %v206, 64
  %vm479 = vcmp.eq.s32.totalorder %v207, 64
  %vm480 = vcmp.eq.s32.totalorder %v208, 64
  %vm481 = vcmp.eq.s32.totalorder %v209, 64
  %vm482 = vcmp.eq.s32.totalorder %v210, 64
  %vm483 = vcmp.eq.s32.totalorder %v211, 64
  %vm484 = vcmp.eq.s32.totalorder %v212, 64
  %vm485 = vcmp.eq.s32.totalorder %v213, 64
  %vm486 = vcmp.eq.s32.totalorder %v214, 64
  %vm487 = vcmp.eq.s32.totalorder %v215, 64
  %vm488 = vcmp.eq.s32.totalorder %v216, 64
  %vm489 = vmand %vm457, %vm473
  %vm490 = vmand %vm458, %vm474
  %vm491 = vmand %vm459, %vm475
  %vm492 = vmand %vm460, %vm476
  %vm493 = vmand %vm461, %vm477
  %vm494 = vmand %vm462, %vm478
  %vm495 = vmand %vm463, %vm479
  %vm496 = vmand %vm464, %vm480
  %vm497 = vmand %vm465, %vm481
  %vm498 = vmand %vm466, %vm482
  %vm499 = vmand %vm467, %vm483
  %vm500 = vmand %vm468, %vm484
  %vm501 = vmand %vm469, %vm485
  %vm502 = vmand %vm470, %vm486
  %vm503 = vmand %vm471, %vm487
  %vm504 = vmand %vm472, %vm488
  %v505 = vsel %vm489, 1, 0
  %v506 = vsel %vm490, 1, 0
  %v507 = vsel %vm491, 1, 0
  %v508 = vsel %vm492, 1, 0
  %v509 = vsel %vm493, 1, 0
  %v510 = vsel %vm494, 1, 0
  %v511 = vsel %vm495, 1, 0
  %v512 = vsel %vm496, 1, 0
  %v513 = vsel %vm497, 1, 0
  %v514 = vsel %vm498, 1, 0
  %v515 = vsel %vm499, 1, 0
  %v516 = vsel %vm500, 1, 0
  %v517 = vsel %vm501, 1, 0
  %v518 = vsel %vm502, 1, 0
  %v519 = vsel %vm503, 1, 0
  %v520 = vsel %vm504, 1, 0
  %v521 = vcvt.s32.f32 %v505
  %v522 = vcvt.s32.f32 %v506
  %v523 = vcvt.s32.f32 %v507
  %v524 = vcvt.s32.f32 %v508
  %v525 = vcvt.s32.f32 %v509
  %v526 = vcvt.s32.f32 %v510
  %v527 = vcvt.s32.f32 %v511
  %v528 = vcvt.s32.f32 %v512
  %v529 = vcvt.s32.f32 %v513
  %v530 = vcvt.s32.f32 %v514
  %v531 = vcvt.s32.f32 %v515
  %v532 = vcvt.s32.f32 %v516
  %v533 = vcvt.s32.f32 %v517
  %v534 = vcvt.s32.f32 %v518
  %v535 = vcvt.s32.f32 %v519
  %v536 = vcvt.s32.f32 %v520
  %v537 = vadd.f32 %v409, %v521
  %v538 = vadd.f32 %v410, %v522
  %v539 = vadd.f32 %v411, %v523
  %v540 = vadd.f32 %v412, %v524
  %v541 = vadd.f32 %v413, %v525
  %v542 = vadd.f32 %v414, %v526
  %v543 = vadd.f32 %v415, %v527
  %v544 = vadd.f32 %v416, %v528
  %v545 = vadd.f32 %v417, %v529
  %v546 = vadd.f32 %v418, %v530
  %v547 = vadd.f32 %v419, %v531
  %v548 = vadd.f32 %v420, %v532
  %v549 = vadd.f32 %v421, %v533
  %v550 = vadd.f32 %v422, %v534
  %v551 = vadd.f32 %v423, %v535
  %v552 = vadd.f32 %v424, %v536
  %vm553 = vcmp.ge.s32.totalorder %v75, 96
  %vm554 = vcmp.ge.s32.totalorder %v86, 96
  %vm555 = vcmp.ge.s32.totalorder %v87, 96
  %vm556 = vcmp.ge.s32.totalorder %v88, 96
  %vm557 = vcmp.ge.s32.totalorder %v89, 96
  %vm558 = vcmp.ge.s32.totalorder %v90, 96
  %vm559 = vcmp.ge.s32.totalorder %v91, 96
  %vm560 = vcmp.ge.s32.totalorder %v92, 96
  %vm561 = vcmp.ge.s32.totalorder %v93, 96
  %vm562 = vcmp.ge.s32.totalorder %v94, 96
  %vm563 = vcmp.ge.s32.totalorder %v95, 96
  %vm564 = vcmp.ge.s32.totalorder %v96, 96
  %vm565 = vcmp.ge.s32.totalorder %v97, 96
  %vm566 = vcmp.ge.s32.totalorder %v98, 96
  %vm567 = vcmp.ge.s32.totalorder %v99, 96
  %vm568 = vcmp.ge.s32.totalorder %v100, 96
  %vm569 = vcmp.lt.s32.totalorder %v75, 128
  %vm570 = vcmp.lt.s32.totalorder %v86, 128
  %vm571 = vcmp.lt.s32.totalorder %v87, 128
  %vm572 = vcmp.lt.s32.totalorder %v88, 128
  %vm573 = vcmp.lt.s32.totalorder %v89, 128
  %vm574 = vcmp.lt.s32.totalorder %v90, 128
  %vm575 = vcmp.lt.s32.totalorder %v91, 128
  %vm576 = vcmp.lt.s32.totalorder %v92, 128
  %vm577 = vcmp.lt.s32.totalorder %v93, 128
  %vm578 = vcmp.lt.s32.totalorder %v94, 128
  %vm579 = vcmp.lt.s32.totalorder %v95, 128
  %vm580 = vcmp.lt.s32.totalorder %v96, 128
  %vm581 = vcmp.lt.s32.totalorder %v97, 128
  %vm582 = vcmp.lt.s32.totalorder %v98, 128
  %vm583 = vcmp.lt.s32.totalorder %v99, 128
  %vm584 = vcmp.lt.s32.totalorder %v100, 128
  %vm585 = vmand %vm553, %vm569
  %vm586 = vmand %vm554, %vm570
  %vm587 = vmand %vm555, %vm571
  %vm588 = vmand %vm556, %vm572
  %vm589 = vmand %vm557, %vm573
  %vm590 = vmand %vm558, %vm574
  %vm591 = vmand %vm559, %vm575
  %vm592 = vmand %vm560, %vm576
  %vm593 = vmand %vm561, %vm577
  %vm594 = vmand %vm562, %vm578
  %vm595 = vmand %vm563, %vm579
  %vm596 = vmand %vm564, %vm580
  %vm597 = vmand %vm565, %vm581
  %vm598 = vmand %vm566, %vm582
  %vm599 = vmand %vm567, %vm583
  %vm600 = vmand %vm568, %vm584
  %vm601 = vcmp.eq.s32.totalorder %v201, 96
  %vm602 = vcmp.eq.s32.totalorder %v202, 96
  %vm603 = vcmp.eq.s32.totalorder %v203, 96
  %vm604 = vcmp.eq.s32.totalorder %v204, 96
  %vm605 = vcmp.eq.s32.totalorder %v205, 96
  %vm606 = vcmp.eq.s32.totalorder %v206, 96
  %vm607 = vcmp.eq.s32.totalorder %v207, 96
  %vm608 = vcmp.eq.s32.totalorder %v208, 96
  %vm609 = vcmp.eq.s32.totalorder %v209, 96
  %vm610 = vcmp.eq.s32.totalorder %v210, 96
  %vm611 = vcmp.eq.s32.totalorder %v211, 96
  %vm612 = vcmp.eq.s32.totalorder %v212, 96
  %vm613 = vcmp.eq.s32.totalorder %v213, 96
  %vm614 = vcmp.eq.s32.totalorder %v214, 96
  %vm615 = vcmp.eq.s32.totalorder %v215, 96
  %vm616 = vcmp.eq.s32.totalorder %v216, 96
  %vm617 = vmand %vm585, %vm601
  %vm618 = vmand %vm586, %vm602
  %vm619 = vmand %vm587, %vm603
  %vm620 = vmand %vm588, %vm604
  %vm621 = vmand %vm589, %vm605
  %vm622 = vmand %vm590, %vm606
  %vm623 = vmand %vm591, %vm607
  %vm624 = vmand %vm592, %vm608
  %vm625 = vmand %vm593, %vm609
  %vm626 = vmand %vm594, %vm610
  %vm627 = vmand %vm595, %vm611
  %vm628 = vmand %vm596, %vm612
  %vm629 = vmand %vm597, %vm613
  %vm630 = vmand %vm598, %vm614
  %vm631 = vmand %vm599, %vm615
  %vm632 = vmand %vm600, %vm616
  %v633 = vsel %vm617, 1, 0
  %v634 = vsel %vm618, 1, 0
  %v635 = vsel %vm619, 1, 0
  %v636 = vsel %vm620, 1, 0
  %v637 = vsel %vm621, 1, 0
  %v638 = vsel %vm622, 1, 0
  %v639 = vsel %vm623, 1, 0
  %v640 = vsel %vm624, 1, 0
  %v641 = vsel %vm625, 1, 0
  %v642 = vsel %vm626, 1, 0
  %v643 = vsel %vm627, 1, 0
  %v644 = vsel %vm628, 1, 0
  %v645 = vsel %vm629, 1, 0
  %v646 = vsel %vm630, 1, 0
  %v647 = vsel %vm631, 1, 0
  %v648 = vsel %vm632, 1, 0
  %v649 = vcvt.s32.f32 %v633
  %v650 = vcvt.s32.f32 %v634
  %v651 = vcvt.s32.f32 %v635
  %v652 = vcvt.s32.f32 %v636
  %v653 = vcvt.s32.f32 %v637
  %v654 = vcvt.s32.f32 %v638
  %v655 = vcvt.s32.f32 %v639
  %v656 = vcvt.s32.f32 %v640
  %v657 = vcvt.s32.f32 %v641
  %v658 = vcvt.s32.f32 %v642
  %v659 = vcvt.s32.f32 %v643
  %v660 = vcvt.s32.f32 %v644
  %v661 = vcvt.s32.f32 %v645
  %v662 = vcvt.s32.f32 %v646
  %v663 = vcvt.s32.f32 %v647
  %v664 = vcvt.s32.f32 %v648
  %v665 = vadd.f32 %v537, %v649
  %v666 = vadd.f32 %v538, %v650
  %v667 = vadd.f32 %v539, %v651
  %v668 = vadd.f32 %v540, %v652
  %v669 = vadd.f32 %v541, %v653
  %v670 = vadd.f32 %v542, %v654
  %v671 = vadd.f32 %v543, %v655
  %v672 = vadd.f32 %v544, %v656
  %v673 = vadd.f32 %v545, %v657
  %v674 = vadd.f32 %v546, %v658
  %v675 = vadd.f32 %v547, %v659
  %v676 = vadd.f32 %v548, %v660
  %v677 = vadd.f32 %v549, %v661
  %v678 = vadd.f32 %v550, %v662
  %v679 = vadd.f32 %v551, %v663
  %v680 = vadd.f32 %v552, %v664
  %v681 = vmul.f32 %v151, %v73
  %vm682 = vcmask 64544
  %v683 = vsel %vm682, %v71, -inf
  %684 = vmax.xlane.f32.xlu0 %v683
  %v685 = vpop.xlane.xlu0 %684
  %v686 = vsub.f32 %v71, %v685
  %v687 = vmul.f32 %v686, 1.442695
  %v688 = vpow.pop %v687
  %690 = vrot.lane.b32.xlu0 %v688, 124
  %v691 = vpop.permute.xlu0 %690
  %v693 = vsel %vm101, %v691, 0.0
  %694 = vadd.xlane.f32.xlu0 %v693
  %v695 = vpop.xlane.xlu0 %694
  %v696 = vrcp.pop %v695
  %v697 = vmul.f32 %v695, %v696
  %v698 = vsub.f32 1.0, %v697
  %v699 = vmul.f32 %v696, %v698
  %v700 = vadd.f32 %v696, %v699
  %vm701 = vweird.f32 %v695
  %vm702 = vweird.f32 %v696
  %vm703 = vmor %vm701, %vm702
  %v704 = vsel %vm703, %v696, %v700
  %v705 = vand.u32 2147483647, %v695
  %vm706 = vcmp.eq.f32.partialorder %v705, 8.507059e+37
  %v707 = vand.u32 %v695, 2147483648
  %v708 = vor.u32 1.1754944e-38, %v707
  %v709 = vsel %vm706, %v708, %v704
  %v710 = vmul.f32 %v688, %v709
  %712 = vrot.lane.b32.xlu0 %v710, 124
  %v713 = vpop.permute.xlu0 %712
  %v714 = vsel %vm101, %v713, 0
  %716 = vmatpush.msra.mxu0 0.0
  %717 = vmatpush.msra.mxu0 0.0
  %718 = vmatpush.msra.mxu0 0.0
  %719 = vmatpush.msra.mxu0 0.0
  %720 = vmatpush.msra.mxu0 0.0
  %721 = vmatpush.msra.mxu0 0.0
  %722 = vmatpush.msra.mxu0 0.0
  %723 = vmatpush.msra.mxu0 0.0
  %724 = vmatpush.msra.mxu0 0.0
  %725 = vmatpush.msra.mxu0 0.0
  %726 = vmatpush.msra.mxu0 0.0
  %727 = vmatpush.msra.mxu0 0.0
  %728 = vmatpush.msra.mxu0 0.0
  %729 = vmatpush.msra.mxu0 0.0
  %730 = vmatpush.msra.mxu0 0.0
  %731 = vmatpush.msra.mxu0 %v131
  %732 = vmatmul.f32.gmra.mxu0 %v714
  %v733 = vpop.f32.mrf.mxu0
  %v734 = vadd.f32 0.0, %v733
  %735 = vdwg.mxu0
  %vm736 = vcmp.eq.s32.totalorder %v201, 4294967264
  %vm737 = vcmp.eq.s32.totalorder %v202, 4294967264
  %vm738 = vcmp.eq.s32.totalorder %v203, 4294967264
  %vm739 = vcmp.eq.s32.totalorder %v204, 4294967264
  %vm740 = vcmp.eq.s32.totalorder %v205, 4294967264
  %vm741 = vcmp.eq.s32.totalorder %v206, 4294967264
  %vm742 = vcmp.eq.s32.totalorder %v207, 4294967264
  %vm743 = vcmp.eq.s32.totalorder %v208, 4294967264
  %vm744 = vcmp.eq.s32.totalorder %v209, 4294967264
  %vm745 = vcmp.eq.s32.totalorder %v210, 4294967264
  %vm746 = vcmp.eq.s32.totalorder %v211, 4294967264
  %vm747 = vcmp.eq.s32.totalorder %v212, 4294967264
  %vm748 = vcmp.eq.s32.totalorder %v213, 4294967264
  %vm749 = vcmp.eq.s32.totalorder %v214, 4294967264
  %vm750 = vcmp.eq.s32.totalorder %v215, 4294967264
  %vm751 = vcmp.eq.s32.totalorder %v216, 4294967264
  %vm752 = vmand %vm185, %vm736
  %vm753 = vmand %vm186, %vm737
  %vm754 = vmand %vm187, %vm738
  %vm755 = vmand %vm188, %vm739
  %vm756 = vmand %vm189, %vm740
  %vm757 = vmand %vm190, %vm741
  %vm758 = vmand %vm191, %vm742
  %vm759 = vmand %vm192, %vm743
  %vm760 = vmand %vm193, %vm744
  %vm761 = vmand %vm194, %vm745
  %vm762 = vmand %vm195, %vm746
  %vm763 = vmand %vm196, %vm747
  %vm764 = vmand %vm197, %vm748
  %vm765 = vmand %vm198, %vm749
  %vm766 = vmand %vm199, %vm750
  %vm767 = vmand %vm200, %vm751
  %v768 = vsel %vm752, 1, 0
  %v769 = vsel %vm753, 1, 0
  %v770 = vsel %vm754, 1, 0
  %v771 = vsel %vm755, 1, 0
  %v772 = vsel %vm756, 1, 0
  %v773 = vsel %vm757, 1, 0
  %v774 = vsel %vm758, 1, 0
  %v775 = vsel %vm759, 1, 0
  %v776 = vsel %vm760, 1, 0
  %v777 = vsel %vm761, 1, 0
  %v778 = vsel %vm762, 1, 0
  %v779 = vsel %vm763, 1, 0
  %v780 = vsel %vm764, 1, 0
  %v781 = vsel %vm765, 1, 0
  %v782 = vsel %vm766, 1, 0
  %v783 = vsel %vm767, 1, 0
  %v784 = vcvt.s32.f32 %v768
  %v785 = vcvt.s32.f32 %v769
  %v786 = vcvt.s32.f32 %v770
  %v787 = vcvt.s32.f32 %v771
  %v788 = vcvt.s32.f32 %v772
  %v789 = vcvt.s32.f32 %v773
  %v790 = vcvt.s32.f32 %v774
  %v791 = vcvt.s32.f32 %v775
  %v792 = vcvt.s32.f32 %v776
  %v793 = vcvt.s32.f32 %v777
  %v794 = vcvt.s32.f32 %v778
  %v795 = vcvt.s32.f32 %v779
  %v796 = vcvt.s32.f32 %v780
  %v797 = vcvt.s32.f32 %v781
  %v798 = vcvt.s32.f32 %v782
  %v799 = vcvt.s32.f32 %v783
  %v800 = vadd.f32 %v784, 0.0
  %v801 = vadd.f32 %v785, 0.0
  %v802 = vadd.f32 %v786, 0.0
  %v803 = vadd.f32 %v787, 0.0
  %v804 = vadd.f32 %v788, 0.0
  %v805 = vadd.f32 %v789, 0.0
  %v806 = vadd.f32 %v790, 0.0
  %v807 = vadd.f32 %v791, 0.0
  %v808 = vadd.f32 %v792, 0.0
  %v809 = vadd.f32 %v793, 0.0
  %v810 = vadd.f32 %v794, 0.0
  %v811 = vadd.f32 %v795, 0.0
  %v812 = vadd.f32 %v796, 0.0
  %v813 = vadd.f32 %v797, 0.0
  %v814 = vadd.f32 %v798, 0.0
  %v815 = vadd.f32 %v799, 0.0
  %vm816 = vmand %vm329, %vm217
  %vm817 = vmand %vm330, %vm218
  %vm818 = vmand %vm331, %vm219
  %vm819 = vmand %vm332, %vm220
  %vm820 = vmand %vm333, %vm221
  %vm821 = vmand %vm334, %vm222
  %vm822 = vmand %vm335, %vm223
  %vm823 = vmand %vm336, %vm224
  %vm824 = vmand %vm337, %vm225
  %vm825 = vmand %vm338, %vm226
  %vm826 = vmand %vm339, %vm227
  %vm827 = vmand %vm340, %vm228
  %vm828 = vmand %vm341, %vm229
  %vm829 = vmand %vm342, %vm230
  %vm830 = vmand %vm343, %vm231
  %vm831 = vmand %vm344, %vm232
  %v832 = vsel %vm816, 1, 0
  %v833 = vsel %vm817, 1, 0
  %v834 = vsel %vm818, 1, 0
  %v835 = vsel %vm819, 1, 0
  %v836 = vsel %vm820, 1, 0
  %v837 = vsel %vm821, 1, 0
  %v838 = vsel %vm822, 1, 0
  %v839 = vsel %vm823, 1, 0
  %v840 = vsel %vm824, 1, 0
  %v841 = vsel %vm825, 1, 0
  %v842 = vsel %vm826, 1, 0
  %v843 = vsel %vm827, 1, 0
  %v844 = vsel %vm828, 1, 0
  %v845 = vsel %vm829, 1, 0
  %v846 = vsel %vm830, 1, 0
  %v847 = vsel %vm831, 1, 0
  %v848 = vcvt.s32.f32 %v832
  %v849 = vcvt.s32.f32 %v833
  %v850 = vcvt.s32.f32 %v834
  %v851 = vcvt.s32.f32 %v835
  %v852 = vcvt.s32.f32 %v836
  %v853 = vcvt.s32.f32 %v837
  %v854 = vcvt.s32.f32 %v838
  %v855 = vcvt.s32.f32 %v839
  %v856 = vcvt.s32.f32 %v840
  %v857 = vcvt.s32.f32 %v841
  %v858 = vcvt.s32.f32 %v842
  %v859 = vcvt.s32.f32 %v843
  %v860 = vcvt.s32.f32 %v844
  %v861 = vcvt.s32.f32 %v845
  %v862 = vcvt.s32.f32 %v846
  %v863 = vcvt.s32.f32 %v847
  %v864 = vadd.f32 %v800, %v848
  %v865 = vadd.f32 %v801, %v849
  %v866 = vadd.f32 %v802, %v850
  %v867 = vadd.f32 %v803, %v851
  %v868 = vadd.f32 %v804, %v852
  %v869 = vadd.f32 %v805, %v853
  %v870 = vadd.f32 %v806, %v854
  %v871 = vadd.f32 %v807, %v855
  %v872 = vadd.f32 %v808, %v856
  %v873 = vadd.f32 %v809, %v857
  %v874 = vadd.f32 %v810, %v858
  %v875 = vadd.f32 %v811, %v859
  %v876 = vadd.f32 %v812, %v860
  %v877 = vadd.f32 %v813, %v861
  %v878 = vadd.f32 %v814, %v862
  %v879 = vadd.f32 %v815, %v863
  %vm880 = vmand %vm457, %vm345
  %vm881 = vmand %vm458, %vm346
  %vm882 = vmand %vm459, %vm347
  %vm883 = vmand %vm460, %vm348
  %vm884 = vmand %vm461, %vm349
  %vm885 = vmand %vm462, %vm350
  %vm886 = vmand %vm463, %vm351
  %vm887 = vmand %vm464, %vm352
  %vm888 = vmand %vm465, %vm353
  %vm889 = vmand %vm466, %vm354
  %vm890 = vmand %vm467, %vm355
  %vm891 = vmand %vm468, %vm356
  %vm892 = vmand %vm469, %vm357
  %vm893 = vmand %vm470, %vm358
  %vm894 = vmand %vm471, %vm359
  %vm895 = vmand %vm472, %vm360
  %v896 = vsel %vm880, 1, 0
  %v897 = vsel %vm881, 1, 0
  %v898 = vsel %vm882, 1, 0
  %v899 = vsel %vm883, 1, 0
  %v900 = vsel %vm884, 1, 0
  %v901 = vsel %vm885, 1, 0
  %v902 = vsel %vm886, 1, 0
  %v903 = vsel %vm887, 1, 0
  %v904 = vsel %vm888, 1, 0
  %v905 = vsel %vm889, 1, 0
  %v906 = vsel %vm890, 1, 0
  %v907 = vsel %vm891, 1, 0
  %v908 = vsel %vm892, 1, 0
  %v909 = vsel %vm893, 1, 0
  %v910 = vsel %vm894, 1, 0
  %v911 = vsel %vm895, 1, 0
  %v912 = vcvt.s32.f32 %v896
  %v913 = vcvt.s32.f32 %v897
  %v914 = vcvt.s32.f32 %v898
  %v915 = vcvt.s32.f32 %v899
  %v916 = vcvt.s32.f32 %v900
  %v917 = vcvt.s32.f32 %v901
  %v918 = vcvt.s32.f32 %v902
  %v919 = vcvt.s32.f32 %v903
  %v920 = vcvt.s32.f32 %v904
  %v921 = vcvt.s32.f32 %v905
  %v922 = vcvt.s32.f32 %v906
  %v923 = vcvt.s32.f32 %v907
  %v924 = vcvt.s32.f32 %v908
  %v925 = vcvt.s32.f32 %v909
  %v926 = vcvt.s32.f32 %v910
  %v927 = vcvt.s32.f32 %v911
  %v928 = vadd.f32 %v864, %v912
  %v929 = vadd.f32 %v865, %v913
  %v930 = vadd.f32 %v866, %v914
  %v931 = vadd.f32 %v867, %v915
  %v932 = vadd.f32 %v868, %v916
  %v933 = vadd.f32 %v869, %v917
  %v934 = vadd.f32 %v870, %v918
  %v935 = vadd.f32 %v871, %v919
  %v936 = vadd.f32 %v872, %v920
  %v937 = vadd.f32 %v873, %v921
  %v938 = vadd.f32 %v874, %v922
  %v939 = vadd.f32 %v875, %v923
  %v940 = vadd.f32 %v876, %v924
  %v941 = vadd.f32 %v877, %v925
  %v942 = vadd.f32 %v878, %v926
  %v943 = vadd.f32 %v879, %v927
  %vm944 = vmand %vm585, %vm473
  %vm945 = vmand %vm586, %vm474
  %vm946 = vmand %vm587, %vm475
  %vm947 = vmand %vm588, %vm476
  %vm948 = vmand %vm589, %vm477
  %vm949 = vmand %vm590, %vm478
  %vm950 = vmand %vm591, %vm479
  %vm951 = vmand %vm592, %vm480
  %vm952 = vmand %vm593, %vm481
  %vm953 = vmand %vm594, %vm482
  %vm954 = vmand %vm595, %vm483
  %vm955 = vmand %vm596, %vm484
  %vm956 = vmand %vm597, %vm485
  %vm957 = vmand %vm598, %vm486
  %vm958 = vmand %vm599, %vm487
  %vm959 = vmand %vm600, %vm488
  %v960 = vsel %vm944, 1, 0
  %v961 = vsel %vm945, 1, 0
  %v962 = vsel %vm946, 1, 0
  %v963 = vsel %vm947, 1, 0
  %v964 = vsel %vm948, 1, 0
  %v965 = vsel %vm949, 1, 0
  %v966 = vsel %vm950, 1, 0
  %v967 = vsel %vm951, 1, 0
  %v968 = vsel %vm952, 1, 0
  %v969 = vsel %vm953, 1, 0
  %v970 = vsel %vm954, 1, 0
  %v971 = vsel %vm955, 1, 0
  %v972 = vsel %vm956, 1, 0
  %v973 = vsel %vm957, 1, 0
  %v974 = vsel %vm958, 1, 0
  %v975 = vsel %vm959, 1, 0
  %v976 = vcvt.s32.f32 %v960
  %v977 = vcvt.s32.f32 %v961
  %v978 = vcvt.s32.f32 %v962
  %v979 = vcvt.s32.f32 %v963
  %v980 = vcvt.s32.f32 %v964
  %v981 = vcvt.s32.f32 %v965
  %v982 = vcvt.s32.f32 %v966
  %v983 = vcvt.s32.f32 %v967
  %v984 = vcvt.s32.f32 %v968
  %v985 = vcvt.s32.f32 %v969
  %v986 = vcvt.s32.f32 %v970
  %v987 = vcvt.s32.f32 %v971
  %v988 = vcvt.s32.f32 %v972
  %v989 = vcvt.s32.f32 %v973
  %v990 = vcvt.s32.f32 %v974
  %v991 = vcvt.s32.f32 %v975
  %v992 = vadd.f32 %v928, %v976
  %v993 = vadd.f32 %v929, %v977
  %v994 = vadd.f32 %v930, %v978
  %v995 = vadd.f32 %v931, %v979
  %v996 = vadd.f32 %v932, %v980
  %v997 = vadd.f32 %v933, %v981
  %v998 = vadd.f32 %v934, %v982
  %v999 = vadd.f32 %v935, %v983
  %v1000 = vadd.f32 %v936, %v984
  %v1001 = vadd.f32 %v937, %v985
  %v1002 = vadd.f32 %v938, %v986
  %v1003 = vadd.f32 %v939, %v987
  %v1004 = vadd.f32 %v940, %v988
  %v1005 = vadd.f32 %v941, %v989
  %v1006 = vadd.f32 %v942, %v990
  %v1007 = vadd.f32 %v943, %v991
  %v1008 = vmul.f32 %v734, %v73
  %1009 = vmatpush.msra.mxu0 %v1007
  %1010 = vmatpush.msra.mxu0 %v1006
  %1011 = vmatpush.msra.mxu0 %v1005
  %1012 = vmatpush.msra.mxu0 %v1004
  %1013 = vmatpush.msra.mxu0 %v1003
  %1014 = vmatpush.msra.mxu0 %v1002
  %1015 = vmatpush.msra.mxu0 %v1001
  %1016 = vmatpush.msra.mxu0 %v1000
  %1017 = vmatpush.msra.mxu0 %v999
  %1018 = vmatpush.msra.mxu0 %v998
  %1019 = vmatpush.msra.mxu0 %v997
  %1020 = vmatpush.msra.mxu0 %v996
  %1021 = vmatpush.msra.mxu0 %v995
  %1022 = vmatpush.msra.mxu0 %v994
  %1023 = vmatpush.msra.mxu0 %v993
  %1024 = vmatpush.msra.mxu0 %v992
  %1025 = vmatmul.f32.gmra.mxu0 %v1008
  %v1026 = vpop.f32.mrf.mxu0
  %v1027 = vadd.f32 0.0, %v1026
  %1028 = vdwg.mxu0
  %1029 = vmatpush.msra.mxu0 %v680
  %1030 = vmatpush.msra.mxu0 %v679
  %1031 = vmatpush.msra.mxu0 %v678
  %1032 = vmatpush.msra.mxu0 %v677
  %1033 = vmatpush.msra.mxu0 %v676
  %1034 = vmatpush.msra.mxu0 %v675
  %1035 = vmatpush.msra.mxu0 %v674
  %1036 = vmatpush.msra.mxu0 %v673
  %1037 = vmatpush.msra.mxu0 %v672
  %1038 = vmatpush.msra.mxu0 %v671
  %1039 = vmatpush.msra.mxu0 %v670
  %1040 = vmatpush.msra.mxu0 %v669
  %1041 = vmatpush.msra.mxu0 %v668
  %1042 = vmatpush.msra.mxu0 %v667
  %1043 = vmatpush.msra.mxu0 %v666
  %1044 = vmatpush.msra.mxu0 %v665
  %1045 = vmatmul.f32.gmra.mxu0 %v681
  %v1046 = vpop.f32.mrf.mxu0
  %v1047 = vadd.f32 %v1027, %v1046
  %1048 = vdwg.mxu0
  %1049 = vst [vmem:[%s3] sm:$0xff] %v1047
  // Predicated region
  $region14: #{mmoe_forward.1} parent=0 // pred_check
    _
  $region15: #{mmoe_forward.1} parent=0 // pred_check_branch
    %1051 = sbr.rel (0) target = $region17
  $region16: #{mmoe_forward.1} parent=0 // pred_region
    _
  $region17: #{mmoe_forward.1} parent=0 // pred_fallthru
    _
  // Predicated region
  $region18: #{mmoe_forward.1} parent=0 // pred_check
    _
  $region19: #{mmoe_forward.1} parent=0 // pred_check_branch
    %1053 = sbr.rel (0) target = $region21
  $region20: #{mmoe_forward.1} parent=0 // pred_region
    _
  $region21: #{mmoe_forward.1} parent=0 // pred_fallthru
    _

</llo_original>
